<compile_context>
chip_gen: v7x
topology: tpu7x:2x2x1
jax: 0.10.0
libtpu: 0.0.40
codegen_flags: <defaults>
</compile_context>

<pallas_src>
import math

import jax
import jax.numpy as jnp
from jax import lax
from jax.experimental import pallas as pl
from jax.experimental.pallas import tpu as pltpu


def _round_up(a, b):
    return (a + b - 1) // b * b


def _cdiv(a, b):
    return (a + b - 1) // b


def _vmem_capacity_bytes(default=64 * 1024 * 1024):
    """Physical VMEM per TensorCore; conservative default if unknown."""
    try:
        info = pltpu.get_tpu_info()
    except Exception:
        return default
    for name in ("vmem_capacity_bytes", "vmem_size_bytes", "vmem_bytes"):
        v = getattr(info, name, None)
        if v:
            return int(v)
    return default


def _pick_f_chunk(F, target):
    """Largest lane-aligned chunk <= target that divides F (no weight padding).

    Prefers multiples of 256 (2x256 MXU on v6e/v7x), then 128.  Falls back to
    padding F only if no aligned divisor exists.  Returns (tf_eff, f_pad).
    """
    if F <= target:
        return F, F
    for step in (256, 128):
        c = (min(target, F) // step) * step
        while c >= step:
            if F % c == 0:
                return c, F
            c -= step
    c = _round_up(min(target, F), 128)
    return c, _round_up(F, c)


def ffn_kernel(x_ref, g_ref, beta_ref, w1_ref, b1_ref, w2_ref, b2_ref,
               o_ref, xn_ref, acc_ref):
    k = pl.program_id(1)
    nk = pl.num_programs(1)

    @pl.when(k == 0)
    def _():
        # LayerNorm over last dim (eps=1e-5, PyTorch default); computed once
        # per row tile and cached in the MXU compute dtype (= weight dtype),
        # so no per-F-chunk recompute or re-cast is needed.
        x = x_ref[...].astype(jnp.float32)
        mean = jnp.mean(x, axis=-1, keepdims=True)
        var = jnp.mean(jnp.square(x - mean), axis=-1, keepdims=True)
        xn = (x - mean) * lax.rsqrt(var + 1e-5)
        xn = xn * g_ref[...].astype(jnp.float32) + beta_ref[...].astype(jnp.float32)
        xn_ref[...] = xn.astype(xn_ref.dtype)
        acc_ref[...] = jnp.zeros_like(acc_ref)

    # Linear1 chunk -> exact (erf) GELU -> Linear2 chunk, accumulated in f32.
    # Operands go to the MXU in the weights' stored dtype (bf16 supported).
    h = jnp.dot(xn_ref[...], w1_ref[...], preferred_element_type=jnp.float32)
    h = h + b1_ref[...].astype(jnp.float32)
    # nn.GELU() default is the exact erf form; keep it for module fidelity.
    h = 0.5 * h * (1.0 + lax.erf(h * (1.0 / math.sqrt(2.0))))
    # Dropout: inference mode => identity.
    # TODO(synk): training-mode dropout (stateful PRNG masking) not implemented.
    acc_ref[...] += jnp.dot(h.astype(w2_ref.dtype), w2_ref[...],
                            preferred_element_type=jnp.float32)

    @pl.when(k == nk - 1)
    def _():
        y = acc_ref[...] + b2_ref[...].astype(jnp.float32)
        o_ref[...] = (x_ref[...].astype(jnp.float32) + y).astype(o_ref.dtype)


def ffn_forward(x, gamma, beta, w1, b1, w2, b2, *, tm=None, tf=None,
                vmem_limit_bytes=None):
    """x: [B, S, D].  w1: [D, F], w2: [F, D].  Returns [B, S, D]."""
    B, S, D = x.shape
    F = w1.shape[1]
    N = B * S

    x_bytes = jnp.dtype(x.dtype).itemsize
    w_bytes = jnp.dtype(w1.dtype).itemsize

    # ---- generation-aware caps ------------------------------------------
    vmem_phys = _vmem_capacity_bytes()
    big_vmem = vmem_phys >= 100 * (1 << 20)          # v5e / v6e: 128 MiB VMEM
    if vmem_limit_bytes is None:
        vmem_limit_bytes = (96 << 20) if big_vmem else (48 << 20)
    tm_cap = tm if tm is not None else (1024 if big_vmem else 512)
    tm_cap = max(8, _round_up(tm_cap, 8))

    def working_set(tm_, tf_):
        # x + out tiles double-buffered, xn (weight dtype) + acc (f32) scratch,
        # W1/W2/b1 chunks double-buffered; gamma/beta/b2 negligible.
        row = tm_ * D * (2 * x_bytes + 2 * x_bytes + w_bytes + 4)
        wts = (2 * 2 * D * tf_ + 2 * tf_) * w_bytes
        return row + wts

    # ---- row tiling (token axis) -----------------------------------------
    tm_eff = min(tm_cap, _round_up(N, 8))
    if tm is None and N >= 512 and _cdiv(N, tm_eff) < 2:
        # 2-TC chips (v7x): keep both TensorCores busy on the parallel row axis.
        tm_eff = _round_up(_cdiv(N, 2), 8)

    # ---- hidden-dim (F) chunking: fully VMEM-resident weights when they fit.
    if tf is not None:
        tf_eff, f_pad = _pick_f_chunk(F, min(tf, F))
    elif working_set(tm_eff, F) <= vmem_limit_bytes:
        tf_eff, f_pad = F, F          # single chunk -> weights loaded once
    else:
        tf_eff, f_pad = _pick_f_chunk(F, 512)

    # ---- shrink until the working set fits the VMEM budget ----------------
    while working_set(tm_eff, tf_eff) > vmem_limit_bytes and tf_eff > 256:
        new_tf, new_pad = _pick_f_chunk(F, tf_eff // 2)
        if new_tf >= tf_eff:
            break
        tf_eff, f_pad = new_tf, new_pad
    while working_set(tm_eff, tf_eff) > vmem_limit_bytes and tm_eff > 64:
        tm_eff = max(64, _round_up(tm_eff // 2, 8))

    n_pad = _round_up(N, tm_eff)

    x2 = x.reshape(N, D)
    if n_pad != N:
        # TODO(synk): masked-store tail handling instead of padding the row axis.
        x2 = jnp.pad(x2, ((0, n_pad - N), (0, 0)))
    if f_pad != F:
        # Only taken when F has no lane-aligned divisor (rare); zero-padded
        # hidden units contribute 0 to the output.
        w1 = jnp.pad(w1, ((0, 0), (0, f_pad - F)))
        b1 = jnp.pad(b1, ((0, f_pad - F),))
        w2 = jnp.pad(w2, ((0, f_pad - F), (0, 0)))

    g2 = gamma.reshape(1, D)
    be2 = beta.reshape(1, D)
    b1_2 = b1.reshape(1, f_pad)
    b2_2 = b2.reshape(1, D)

    grid = (n_pad // tm_eff, f_pad // tf_eff)

    out = pl.pallas_call(
        ffn_kernel,
        out_shape=jax.ShapeDtypeStruct((n_pad, D), x.dtype),
        grid_spec=pltpu.PrefetchScalarGridSpec(
            num_scalar_prefetch=0,
            grid=grid,
            in_specs=[
                pl.BlockSpec((tm_eff, D), lambda i, k: (i, 0)),     # x row tile
                pl.BlockSpec((1, D), lambda i, k: (0, 0)),          # gamma
                pl.BlockSpec((1, D), lambda i, k: (0, 0)),          # beta
                pl.BlockSpec((D, tf_eff), lambda i, k: (0, k)),     # W1 chunk
                pl.BlockSpec((1, tf_eff), lambda i, k: (0, k)),     # b1 chunk
                pl.BlockSpec((tf_eff, D), lambda i, k: (k, 0)),     # W2 chunk
                pl.BlockSpec((1, D), lambda i, k: (0, 0)),          # b2
            ],
            out_specs=pl.BlockSpec((tm_eff, D), lambda i, k: (i, 0)),
            scratch_shapes=[
                pltpu.VMEM((tm_eff, D), w1.dtype),     # cached LayerNorm output
                pltpu.VMEM((tm_eff, D), jnp.float32),  # f32 accumulator
            ],
        ),
        compiler_params=pltpu.CompilerParams(
            dimension_semantics=("parallel", "arbitrary"),
            vmem_limit_bytes=vmem_limit_bytes),
    )(x2, g2, be2, w1, b1_2, w2, b2_2)

    if n_pad != N:
        out = out[:N]
    return out.reshape(B, S, D)


def init_params(key, latent_dim, ffn_dim, dtype=jnp.float32):
    """Parameter init mirroring the PyTorch module.

    linear1: PyTorch default uniform(+-1/sqrt(fan_in)),
    linear2: zero_module -> all zeros,
    norm: weight=1, bias=0.
    Weights stored as [in, out] so the kernel does x @ W.
    """
    k1, k2 = jax.random.split(key)
    bound1 = 1.0 / math.sqrt(latent_dim)
    w1 = jax.random.uniform(k1, (latent_dim, ffn_dim), jnp.float32,
                            minval=-bound1, maxval=bound1).astype(dtype)
    b1 = jax.random.uniform(k2, (ffn_dim,), jnp.float32,
                            minval=-bound1, maxval=bound1).astype(dtype)
    w2 = jnp.zeros((ffn_dim, latent_dim), dtype)   # zero_module
    b2 = jnp.zeros((latent_dim,), dtype)
    gamma = jnp.ones((latent_dim,), dtype)
    beta = jnp.zeros((latent_dim,), dtype)
    return gamma, beta, w1, b1, w2, b2


def ffn_reference(x, gamma, beta, w1, b1, w2, b2):
    x = x.astype(jnp.float32)
    gamma, beta, w1, b1, w2, b2 = (a.astype(jnp.float32)
                                   for a in (gamma, beta, w1, b1, w2, b2))
    mean = jnp.mean(x, axis=-1, keepdims=True)
    var = jnp.mean((x - mean) ** 2, axis=-1, keepdims=True)
    xn = (x - mean) / jnp.sqrt(var + 1e-5) * gamma + beta
    h = xn @ w1 + b1
    h = 0.5 * h * (1.0 + lax.erf(h / math.sqrt(2.0)))
    y = h @ w2 + b2
    return x + y


if __name__ == "__main__":
    key = jax.random.PRNGKey(0)
    kx, kp, kw, kbig = jax.random.split(key, 4)

    B, S, latent_dim, ffn_dim = 2, 8, 32, 64
    x = jax.random.normal(kx, (B, S, latent_dim), jnp.float32)

    # 1) Module-faithful params (linear2 zero-init): output must equal x.
    params = init_params(kp, latent_dim, ffn_dim)
    out = jax.block_until_ready(ffn_forward(x, *params))
    ref = ffn_reference(x, *params)
    assert out.shape == (B, S, latent_dim)
    assert jnp.allclose(out, ref, atol=1e-4, rtol=1e-4), "mismatch (zero-init W2)"

    # 2) Non-zero W2/b2 so the matmul / GELU path is actually validated.
    gamma, beta, w1, b1, w2, b2 = params
    kw1, kw2 = jax.random.split(kw)
    w2_nz = jax.random.normal(kw1, w2.shape, jnp.float32) * 0.05
    b2_nz = jax.random.normal(kw2, b2.shape, jnp.float32) * 0.05
    out = jax.block_until_ready(
        ffn_forward(x, gamma, beta, w1, b1, w2_nz, b2_nz))
    ref = ffn_reference(x, gamma, beta, w1, b1, w2_nz, b2_nz)
    assert jnp.allclose(out, ref, atol=1e-4, rtol=1e-4), "mismatch (nonzero W2)"

    # 3) bf16 weights fed directly to the MXU (f32 accumulation, bf16 xn cache).
    bf = jnp.bfloat16
    out_bf = jax.block_until_ready(
        ffn_forward(x, gamma.astype(bf), beta.astype(bf), w1.astype(bf),
                    b1.astype(bf), w2_nz.astype(bf), b2_nz.astype(bf)))
    ref_bf = ffn_reference(x, gamma.astype(bf), beta.astype(bf), w1.astype(bf),
                           b1.astype(bf), w2_nz.astype(bf), b2_nz.astype(bf))
    assert jnp.allclose(out_bf, ref_bf, atol=3e-2, rtol=3e-2), "mismatch (bf16)"

    # 4) Multi-tile path: ragged row count + forced small tm/tf so both grid
    #    axes exceed 1 (validates the accumulator / cached-xn logic).
    B2, S2, D2, F2 = 3, 70, 128, 512          # N = 210 (ragged), F chunked
    kxa, kpa, kwa = jax.random.split(kbig, 3)
    x_big = jax.random.normal(kxa, (B2, S2, D2), jnp.float32)
    g_, be_, w1_, b1_, w2_, b2_ = init_params(kpa, D2, F2)
    w2_ = jax.random.normal(kwa, w2_.shape, jnp.float32) * 0.02
    out2 = jax.block_until_ready(
        ffn_forward(x_big, g_, be_, w1_, b1_, w2_, b2_, tm=64, tf=256))
    ref2 = ffn_reference(x_big, g_, be_, w1_, b1_, w2_, b2_)
    assert jnp.allclose(out2, ref2, atol=1e-4, rtol=1e-4), "mismatch (chunked grid)"

    print("KERNEL_OK")
</pallas_src>

<mosaic_0001>
module attributes {stable_mosaic.version = 11 : i64} {
  func.func @ffn_kernel(%arg0: i32, %arg1: i32, %arg2: memref<16x32xf32, #tpu.memory_space<vmem>>, %arg3: memref<1x32xf32, #tpu.memory_space<vmem>>, %arg4: memref<1x32xf32, #tpu.memory_space<vmem>>, %arg5: memref<32x64xf32, #tpu.memory_space<vmem>>, %arg6: memref<1x64xf32, #tpu.memory_space<vmem>>, %arg7: memref<64x32xf32, #tpu.memory_space<vmem>>, %arg8: memref<1x32xf32, #tpu.memory_space<vmem>>, %arg9: memref<16x32xf32, #tpu.memory_space<vmem>>, %arg10: memref<16x32xf32, #tpu.memory_space<vmem>>, %arg11: memref<16x32xf32, #tpu.memory_space<vmem>>) attributes {dimension_semantics = [#tpu.dimension_semantics<parallel>, #tpu.dimension_semantics<arbitrary>], iteration_bounds = array<i64: 1, 1>, scalar_prefetch = 0 : i64, scratch_operands = 2 : i64, tpu.core_type = #tpu.core_type<tc>, window_params = [{transform_indices = @transform_0, window_bounds = array<i64: 16, 32>}, {pipeline_mode = #tpu.pipeline_mode<synchronous>, transform_indices = @transform_1, window_bounds = array<i64: 1, 32>}, {pipeline_mode = #tpu.pipeline_mode<synchronous>, transform_indices = @transform_2, window_bounds = array<i64: 1, 32>}, {transform_indices = @transform_3, window_bounds = array<i64: 32, 64>}, {transform_indices = @transform_4, window_bounds = array<i64: 1, 64>}, {transform_indices = @transform_5, window_bounds = array<i64: 64, 32>}, {pipeline_mode = #tpu.pipeline_mode<synchronous>, transform_indices = @transform_6, window_bounds = array<i64: 1, 32>}, {transform_indices = @transform_7, window_bounds = array<i64: 16, 32>}]} {
    %c0_i32 = arith.constant 0 : i32
    %0 = arith.cmpi eq, %arg1, %c0_i32 : i32
    %1 = arith.extui %0 : i1 to i32
    %c0_i32_0 = arith.constant 0 : i32
    %2 = arith.cmpi ne, %1, %c0_i32_0 : i32
    scf.if %2 {
      %c0_18 = arith.constant 0 : index
      %c0_19 = arith.constant 0 : index
      %25 = vector.load %arg2[%c0_18, %c0_19] : memref<16x32xf32, #tpu.memory_space<vmem>>, vector<16x32xf32>
      %cst_20 = arith.constant dense<0.000000e+00> : vector<16xf32>
      %26 = vector.multi_reduction <add>, %25, %cst_20 [1] : vector<16x32xf32> to vector<16xf32>
      %27 = vector.shape_cast %26 : vector<16xf32> to vector<16x1xf32>
      %cst_21 = arith.constant 3.200000e+01 : f32
      %28 = vector.broadcast %cst_21 : f32 to vector<16x1xf32>
      %29 = arith.divf %27, %28 : vector<16x1xf32>
      %30 = vector.broadcast %29 : vector<16x1xf32> to vector<16x32xf32>
      %31 = arith.subf %25, %30 : vector<16x32xf32>
      %32 = arith.mulf %31, %31 : vector<16x32xf32>
      %cst_22 = arith.constant dense<0.000000e+00> : vector<16xf32>
      %33 = vector.multi_reduction <add>, %32, %cst_22 [1] : vector<16x32xf32> to vector<16xf32>
      %34 = vector.shape_cast %33 : vector<16xf32> to vector<16x1xf32>
      %cst_23 = arith.constant 3.200000e+01 : f32
      %35 = vector.broadcast %cst_23 : f32 to vector<16x1xf32>
      %36 = arith.divf %34, %35 : vector<16x1xf32>
      %37 = vector.broadcast %29 : vector<16x1xf32> to vector<16x32xf32>
      %38 = arith.subf %25, %37 : vector<16x32xf32>
      %cst_24 = arith.constant 9.99999974E-6 : f32
      %39 = vector.broadcast %cst_24 : f32 to vector<16x1xf32>
      %40 = arith.addf %36, %39 : vector<16x1xf32>
      %41 = math.rsqrt %40 : vector<16x1xf32>
      %42 = vector.broadcast %41 : vector<16x1xf32> to vector<16x32xf32>
      %43 = arith.mulf %38, %42 : vector<16x32xf32>
      %c0_25 = arith.constant 0 : index
      %c0_26 = arith.constant 0 : index
      %44 = vector.load %arg3[%c0_25, %c0_26] : memref<1x32xf32, #tpu.memory_space<vmem>>, vector<1x32xf32>
      %45 = vector.broadcast %44 : vector<1x32xf32> to vector<16x32xf32>
      %46 = arith.mulf %43, %45 : vector<16x32xf32>
      %c0_27 = arith.constant 0 : index
      %c0_28 = arith.constant 0 : index
      %47 = vector.load %arg4[%c0_27, %c0_28] : memref<1x32xf32, #tpu.memory_space<vmem>>, vector<1x32xf32>
      %48 = vector.broadcast %47 : vector<1x32xf32> to vector<16x32xf32>
      %49 = arith.addf %46, %48 : vector<16x32xf32>
      %c0_29 = arith.constant 0 : index
      %c0_30 = arith.constant 0 : index
      %50 = vector.load %arg10[%c0_29, %c0_30] : memref<16x32xf32, #tpu.memory_space<vmem>>, vector<16x32xf32>
      tpu.vector_store %arg10[%c0_29, %c0_30], %49 {strides = array<i32>} : memref<16x32xf32, #tpu.memory_space<vmem>>, vector<16x32xf32>,
      %cst_31 = arith.constant 0.000000e+00 : f32
      %51 = vector.broadcast %cst_31 : f32 to vector<16x32xf32>
      %c0_32 = arith.constant 0 : index
      %c0_33 = arith.constant 0 : index
      %52 = vector.load %arg11[%c0_32, %c0_33] : memref<16x32xf32, #tpu.memory_space<vmem>>, vector<16x32xf32>
      tpu.vector_store %arg11[%c0_32, %c0_33], %51 {strides = array<i32>} : memref<16x32xf32, #tpu.memory_space<vmem>>, vector<16x32xf32>,
    } else {
    }
    %c0 = arith.constant 0 : index
    %c0_1 = arith.constant 0 : index
    %3 = vector.load %arg10[%c0, %c0_1] : memref<16x32xf32, #tpu.memory_space<vmem>>, vector<16x32xf32>
    %c0_2 = arith.constant 0 : index
    %c0_3 = arith.constant 0 : index
    %4 = vector.load %arg5[%c0_2, %c0_3] : memref<32x64xf32, #tpu.memory_space<vmem>>, vector<32x64xf32>
    %cst = arith.constant dense<0.000000e+00> : vector<16x64xf32>
    %5 = tpu.matmul %3, %4, %cst {dimension_numbers = #tpu.dot_dimension_numbers<[1], [0], [0], [1], [0, 0, 1, 1], [], []>} : vector<16x32xf32>, vector<32x64xf32>, vector<16x64xf32> -> vector<16x64xf32>
    %c0_4 = arith.constant 0 : index
    %c0_5 = arith.constant 0 : index
    %6 = vector.load %arg6[%c0_4, %c0_5] : memref<1x64xf32, #tpu.memory_space<vmem>>, vector<1x64xf32>
    %7 = vector.broadcast %6 : vector<1x64xf32> to vector<16x64xf32>
    %8 = arith.addf %5, %7 : vector<16x64xf32>
    %cst_6 = arith.constant 5.000000e-01 : f32
    %9 = vector.broadcast %cst_6 : f32 to vector<16x64xf32>
    %10 = arith.mulf %9, %8 : vector<16x64xf32>
    %cst_7 = arith.constant 0.707106769 : f32
    %11 = vector.broadcast %cst_7 : f32 to vector<16x64xf32>
    %12 = arith.mulf %8, %11 : vector<16x64xf32>
    %13 = math.erf %12 : vector<16x64xf32>
    %cst_8 = arith.constant 1.000000e+00 : f32
    %14 = vector.broadcast %cst_8 : f32 to vector<16x64xf32>
    %15 = arith.addf %14, %13 : vector<16x64xf32>
    %16 = arith.mulf %10, %15 : vector<16x64xf32>
    %c0_9 = arith.constant 0 : index
    %c0_10 = arith.constant 0 : index
    %17 = vector.load %arg11[%c0_9, %c0_10] : memref<16x32xf32, #tpu.memory_space<vmem>>, vector<16x32xf32>
    %c0_11 = arith.constant 0 : index
    %c0_12 = arith.constant 0 : index
    %18 = vector.load %arg7[%c0_11, %c0_12] : memref<64x32xf32, #tpu.memory_space<vmem>>, vector<64x32xf32>
    %cst_13 = arith.constant dense<0.000000e+00> : vector<16x32xf32>
    %19 = tpu.matmul %16, %18, %cst_13 {dimension_numbers = #tpu.dot_dimension_numbers<[1], [0], [0], [1], [0, 0, 1, 1], [], []>} : vector<16x64xf32>, vector<64x32xf32>, vector<16x32xf32> -> vector<16x32xf32>
    %20 = arith.addf %17, %19 : vector<16x32xf32>
    %c0_14 = arith.constant 0 : index
    %c0_15 = arith.constant 0 : index
    %21 = vector.load %arg11[%c0_14, %c0_15] : memref<16x32xf32, #tpu.memory_space<vmem>>, vector<16x32xf32>
    tpu.vector_store %arg11[%c0_14, %c0_15], %20 {strides = array<i32>} : memref<16x32xf32, #tpu.memory_space<vmem>>, vector<16x32xf32>,
    %c0_i32_16 = arith.constant 0 : i32
    %22 = arith.cmpi eq, %arg1, %c0_i32_16 : i32
    %23 = arith.extui %22 : i1 to i32
    %c0_i32_17 = arith.constant 0 : i32
    %24 = arith.cmpi ne, %23, %c0_i32_17 : i32
    scf.if %24 {
      %c0_18 = arith.constant 0 : index
      %c0_19 = arith.constant 0 : index
      %25 = vector.load %arg11[%c0_18, %c0_19] : memref<16x32xf32, #tpu.memory_space<vmem>>, vector<16x32xf32>
      %c0_20 = arith.constant 0 : index
      %c0_21 = arith.constant 0 : index
      %26 = vector.load %arg8[%c0_20, %c0_21] : memref<1x32xf32, #tpu.memory_space<vmem>>, vector<1x32xf32>
      %27 = vector.broadcast %26 : vector<1x32xf32> to vector<16x32xf32>
      %28 = arith.addf %25, %27 : vector<16x32xf32>
      %c0_22 = arith.constant 0 : index
      %c0_23 = arith.constant 0 : index
      %29 = vector.load %arg2[%c0_22, %c0_23] : memref<16x32xf32, #tpu.memory_space<vmem>>, vector<16x32xf32>
      %30 = arith.addf %29, %28 : vector<16x32xf32>
      %c0_24 = arith.constant 0 : index
      %c0_25 = arith.constant 0 : index
      %31 = vector.load %arg9[%c0_24, %c0_25] : memref<16x32xf32, #tpu.memory_space<vmem>>, vector<16x32xf32>
      tpu.vector_store %arg9[%c0_24, %c0_25], %30 {strides = array<i32>} : memref<16x32xf32, #tpu.memory_space<vmem>>, vector<16x32xf32>,
    } else {
    }
    return
  }
  func.func @transform_0(%arg0: i32, %arg1: i32) -> (i32, i32) {
    %c0_i32 = arith.constant 0 : i32
    %c0_i32_0 = arith.constant 0 : i32
    return %arg0, %c0_i32 : i32, i32
  }
  func.func @transform_1(%arg0: i32, %arg1: i32) -> (i32, i32) {
    %c0_i32 = arith.constant 0 : i32
    %c0_i32_0 = arith.constant 0 : i32
    %c0_i32_1 = arith.constant 0 : i32
    return %c0_i32, %c0_i32_0 : i32, i32
  }
  func.func @transform_2(%arg0: i32, %arg1: i32) -> (i32, i32) {
    %c0_i32 = arith.constant 0 : i32
    %c0_i32_0 = arith.constant 0 : i32
    %c0_i32_1 = arith.constant 0 : i32
    return %c0_i32, %c0_i32_0 : i32, i32
  }
  func.func @transform_3(%arg0: i32, %arg1: i32) -> (i32, i32) {
    %c0_i32 = arith.constant 0 : i32
    %c0_i32_0 = arith.constant 0 : i32
    return %c0_i32, %arg1 : i32, i32
  }
  func.func @transform_4(%arg0: i32, %arg1: i32) -> (i32, i32) {
    %c0_i32 = arith.constant 0 : i32
    %c0_i32_0 = arith.constant 0 : i32
    return %c0_i32, %arg1 : i32, i32
  }
  func.func @transform_5(%arg0: i32, %arg1: i32) -> (i32, i32) {
    %c0_i32 = arith.constant 0 : i32
    %c0_i32_0 = arith.constant 0 : i32
    return %arg1, %c0_i32 : i32, i32
  }
  func.func @transform_6(%arg0: i32, %arg1: i32) -> (i32, i32) {
    %c0_i32 = arith.constant 0 : i32
    %c0_i32_0 = arith.constant 0 : i32
    %c0_i32_1 = arith.constant 0 : i32
    return %c0_i32, %c0_i32_0 : i32, i32
  }
  func.func @transform_7(%arg0: i32, %arg1: i32) -> (i32, i32) {
    %c0_i32 = arith.constant 0 : i32
    %c0_i32_0 = arith.constant 0 : i32
    return %arg0, %c0_i32 : i32, i32
  }
}

</mosaic_0001>

<llo_original>
// kernel: tpu_custom_call.1
$region0: #{tpu_custom_call.1}
  #allocation0 [shape = 'u32[]', space=smem, size = 0x4, offset = 0x4, fixed_abs, tag = 'smem constant byte address 0x4 - core index']
  #allocation1 [shape = 'u32[144,128]{1,0:T(1,128)}', space=vmem, size = 0x12000, scoped, tag = 'internal scratch']
  #allocation2 [shape = 'f32[16,32]{1,0:T(8,128)}', space=vmem, size = 0x2000, scoped, tag = 'scratch operand']
  #allocation3 [shape = 'f32[16,32]{1,0:T(8,128)}', space=vmem, size = 0x2000, scoped, tag = 'scratch operand']
  %s0 = inlined_call_operand.vmem [shape: f32[16,32], index: 0, kind: input, shape index: {}]
  %s1 = inlined_call_operand.vmem [shape: f32[1,32], index: 1, kind: input, shape index: {}]
  %s2 = inlined_call_operand.vmem [shape: f32[1,32], index: 2, kind: input, shape index: {}]
  %s3 = inlined_call_operand.vmem [shape: f32[32,64], index: 3, kind: input, shape index: {}]
  %s4 = inlined_call_operand.vmem [shape: f32[1,64], index: 4, kind: input, shape index: {}]
  %s5 = inlined_call_operand.vmem [shape: f32[64,32], index: 5, kind: input, shape index: {}]
  %s6 = inlined_call_operand.vmem [shape: f32[1,32], index: 6, kind: input, shape index: {}]
  %s7 = inlined_call_operand.hbm [shape: f32[16,32], index: 7, kind: output, shape index: {}]
  %s8 = sld [smem:[#allocation0]]
  $region46: #{tpu_custom_call.1} parent=0
    _
  %s10 = ssub.s32 1, %s8
  %s11 = scalar_select 0, %s10, %s8
  $region1: #{tpu_custom_call.1} parent=0
    #allocation4 [shape = 'u8[8192]{0}', space=vmem, size = 0x2000, scoped, tag = 'output window, operand 0, single buffered']
    #allocation5 [shape = 's32[1]{0}', space=sflag, size = 0x4, scoped, tag = 'scoped memory for tpu_custom_call.1']
    %12 = vsyncpa [#allocation5], 0
    // Predicated region
    $region2: #{tpu_custom_call.1} parent=1 // pred_check
      _
    $region3: #{tpu_custom_call.1} parent=1 // pred_check_branch
      %14 = sbr.rel (0) target = $region5
    $region4: #{tpu_custom_call.1} parent=1 // pred_region
      _
    $region5: #{tpu_custom_call.1} parent=1 // pred_fallthru
      _
    // Predicated region
    $region6: #{tpu_custom_call.1} parent=1 // pred_check
      _
    $region7: #{tpu_custom_call.1} parent=1 // pred_check_branch
      %16 = sbr.rel (0) target = $region9
    $region8: #{tpu_custom_call.1} parent=1 // pred_region
      _
    $region9: #{tpu_custom_call.1} parent=1 // pred_fallthru
      _
    // Predicated region
    $region10: #{tpu_custom_call.1} parent=1 // pred_check
      _
    $region11: #{tpu_custom_call.1} parent=1 // pred_check_branch
      %18 = sbr.rel (0) target = $region13
    $region12: #{tpu_custom_call.1} parent=1 // pred_region
      _
    $region13: #{tpu_custom_call.1} parent=1 // pred_fallthru
      _
    // Predicated region
    $region14: #{tpu_custom_call.1} parent=1 // pred_check
      _
    $region15: #{tpu_custom_call.1} parent=1 // pred_check_branch
      %20 = sbr.rel (0) target = $region17
    $region16: #{tpu_custom_call.1} parent=1 // pred_region
      _
    $region17: #{tpu_custom_call.1} parent=1 // pred_fallthru
      _
    // Predicated region
    $region18: #{tpu_custom_call.1} parent=1 // pred_check
      _
    $region19: #{tpu_custom_call.1} parent=1 // pred_check_branch
      %22 = sbr.rel (0) target = $region21
    $region20: #{tpu_custom_call.1} parent=1 // pred_region
      _
    $region21: #{tpu_custom_call.1} parent=1 // pred_fallthru
      _
    // Predicated region
    $region22: #{tpu_custom_call.1} parent=1 // pred_check
      _
    $region23: #{tpu_custom_call.1} parent=1 // pred_check_branch
      %24 = sbr.rel (0) target = $region25
    $region24: #{tpu_custom_call.1} parent=1 // pred_region
      _
    $region25: #{tpu_custom_call.1} parent=1 // pred_fallthru
      _
    // Predicated region
    $region26: #{tpu_custom_call.1} parent=1 // pred_check
      _
    $region27: #{tpu_custom_call.1} parent=1 // pred_check_branch
      %26 = sbr.rel (0) target = $region29
    $region28: #{tpu_custom_call.1} parent=1 // pred_region
      _
    $region29: #{tpu_custom_call.1} parent=1 // pred_fallthru
      _
    %p27 = scmp.eq.s32.totalorder 0, 0
    // Predicated region
    $region30: #{tpu_custom_call.1} parent=1 // pred_check
      %p28 = pneg %p27
    $region31: #{tpu_custom_call.1} parent=1 // pred_check_branch
      %30 = sbr.rel (%p28) target = $region33
    $region32: #{tpu_custom_call.1} parent=1 // pred_region
      %v31 = vld [vmem:[%s0] sm:$0xff]
      %v32 = vld [vmem:[%s0 + $0x8] sm:$0xff]
      %vm33 = vcmask 261120
      %v34 = vsel %vm33, %v31, 0.0
      %35 = vadd.xlane.f32.xlu0 %v34
      %v36 = vpop.xlane.xlu0 %35
      %v37 = vsel %vm33, %v32, 0.0
      %38 = vadd.xlane.f32.xlu0 %v37
      %v39 = vpop.xlane.xlu0 %38
      %v40 = vrcp.pop 32.0
      %v41 = vmul.f32 %v36, %v40
      %v42 = vmul.f32 %v39, %v40
      %v43 = vsub.f32 %v31, %v41
      %v44 = vsub.f32 %v32, %v42
      %v45 = vmul.f32 %v43, %v43
      %v46 = vmul.f32 %v44, %v44
      %v47 = vsel %vm33, %v45, 0.0
      %48 = vadd.xlane.f32.xlu0 %v47
      %v49 = vpop.xlane.xlu0 %48
      %v50 = vsel %vm33, %v46, 0.0
      %51 = vadd.xlane.f32.xlu0 %v50
      %v52 = vpop.xlane.xlu0 %51
      %v53 = vmul.f32 %v49, %v40
      %v54 = vmul.f32 %v52, %v40
      %v55 = vadd.f32 %v53, 1e-05
      %v56 = vadd.f32 %v54, 1e-05
      %v57 = vrsqrt.pop %v55
      %v58 = vrsqrt.pop %v56
      %v59 = vmul.f32 %v43, %v57
      %v60 = vmul.f32 %v44, %v58
      %v61 = vld [vmem:[%s1] sm:$0x1]
      %v63 = vlaneseq
      %v64 = vshrl.u32 %v63, 7
      %v65 = vsub.s32 0, %v64
      %v66 = vrot.slane %v61, %v65
      %v68 = vmul.f32 %v59, %v66
      %v69 = vmul.f32 %v60, %v66
      %v70 = vld [vmem:[%s2] sm:$0x1]
      %v72 = vlaneseq
      %v73 = vshrl.u32 %v72, 7
      %v74 = vsub.s32 0, %v73
      %v75 = vrot.slane %v70, %v74
      %v77 = vadd.f32 %v68, %v75
      %v78 = vadd.f32 %v69, %v75
      %79 = vst.msk [vmem:[#allocation2] sm:$0xff] %vm33, %v77
      %80 = vst.msk [vmem:[#allocation2 + $0x8] sm:$0xff] %vm33, %v78
      %81 = vst.msk [vmem:[#allocation3] sm:$0xff] %vm33, 0.0
      %82 = vst.msk [vmem:[#allocation3 + $0x8] sm:$0xff] %vm33, 0.0
    $region33: #{tpu_custom_call.1} parent=1 // pred_fallthru
      _
    %v83 = vld [vmem:[#allocation2] sm:$0xff]
    %v84 = vld [vmem:[#allocation2 + $0x8] sm:$0xff]
    %v85 = vld [vmem:[%s3] sm:$0xff]
    %v86 = vld [vmem:[%s3 + $0x8] sm:$0xff]
    %v87 = vld [vmem:[%s3 + $0x10] sm:$0xff]
    %v88 = vld [vmem:[%s3 + $0x18] sm:$0xff]
    %v89 = vld [vmem:[%s4] sm:$0x1]
    %v91 = vlaneseq
    %v92 = vshrl.u32 %v91, 7
    %v93 = vsub.s32 0, %v92
    %v94 = vrot.slane %v89, %v93
    %vm96 = vcmask 261120
    %v98 = vsel %vm96, %v83, 0
    %v101 = vsel %vm96, %v84, 0
    %103 = vmatprep.subr.mxu0 0.0
    %104 = vmatpush1.msra.mxu0 %v85
    %105 = vmatprep.subr.mxu0 0.0
    %106 = vmatpush1.msra.mxu0 %v86
    %107 = vmatprep.subr.mxu0 0.0
    %108 = vmatpush1.msra.mxu0 %v87
    %109 = vmatprep.subr.mxu0 0.0
    %110 = vmatpush1.msra.mxu0 %v88
    %111 = vmatprep.subr.mxu0 0.0
    %112 = vmatpush1.msra.mxu0 0.0
    %113 = vmatprep.subr.mxu0 0.0
    %114 = vmatpush1.msra.mxu0 0.0
    %115 = vmatprep.subr.mxu0 0.0
    %116 = vmatpush1.msra.mxu0 0.0
    %117 = vmatprep.subr.mxu0 0.0
    %118 = vmatpush1.msra.mxu0 0.0
    %119 = vmatprep.subr.mxu0 0.0
    %120 = vmatpush1.msra.mxu0 0.0
    %121 = vmatprep.subr.mxu0 0.0
    %122 = vmatpush1.msra.mxu0 0.0
    %123 = vmatprep.subr.mxu0 0.0
    %124 = vmatpush1.msra.mxu0 0.0
    %125 = vmatprep.subr.mxu0 0.0
    %126 = vmatpush1.msra.mxu0 0.0
    %127 = vmatprep.subr.mxu0 0.0
    %128 = vmatpush1.msra.mxu0 0.0
    %129 = vmatprep.subr.mxu0 0.0
    %130 = vmatpush1.msra.mxu0 0.0
    %131 = vmatprep.subr.mxu0 0.0
    %132 = vmatpush1.msra.mxu0 0.0
    %133 = vmatprep.subr.mxu0 0.0
    %134 = vmatpush1.msra.mxu0 0.0
    %135 = vmatprep.subr.mxu0 0.0
    %136 = vmatpush1.msra.mxu0 0.0
    %137 = vmatprep.subr.mxu0 0.0
    %138 = vmatpush1.msra.mxu0 0.0
    %139 = vmatprep.subr.mxu0 0.0
    %140 = vmatpush1.msra.mxu0 0.0
    %141 = vmatprep.subr.mxu0 0.0
    %142 = vmatpush1.msra.mxu0 0.0
    %143 = vmatprep.subr.mxu0 0.0
    %144 = vmatpush1.msra.mxu0 0.0
    %145 = vmatprep.subr.mxu0 0.0
    %146 = vmatpush1.msra.mxu0 0.0
    %147 = vmatprep.subr.mxu0 0.0
    %148 = vmatpush1.msra.mxu0 0.0
    %149 = vmatprep.subr.mxu0 0.0
    %150 = vmatpush1.msra.mxu0 0.0
    %151 = vmatprep.subr.mxu0 0.0
    %152 = vmatpush1.msra.mxu0 0.0
    %153 = vmatprep.subr.mxu0 0.0
    %154 = vmatpush1.msra.mxu0 0.0
    %155 = vmatprep.subr.mxu0 0.0
    %156 = vmatpush1.msra.mxu0 0.0
    %157 = vmatprep.subr.mxu0 0.0
    %158 = vmatpush1.msra.mxu0 0.0
    %159 = vmatprep.subr.mxu0 0.0
    %160 = vmatpush1.msra.mxu0 0.0
    %161 = vmatprep.subr.mxu0 0.0
    %162 = vmatpush1.msra.mxu0 0.0
    %163 = vmatprep.subr.mxu0 0.0
    %164 = vmatpush1.msra.mxu0 0.0
    %165 = vmatprep.subr.mxu0 0.0
    %166 = vmatpush1.msra.mxu0 0.0
    %167 = vmatprep.mubr.f32.mxu0 0.0
    %168 = vmatmul.mubr.f32.gmra.mrb[0].mxu0 %v98
    %v169 = vpop.f32.mrb[0].mxu0
    %v170 = vadd.f32 %v94, %v169
    %v171 = vpop.f32.mrb[0].mxu0
    %172 = vmatprep.mubr.f32.mxu0 0.0
    %173 = vmatmul.mubr.f32.gmra.mrb[0].mxu0 %v101
    %v174 = vpop.f32.mrb[0].mxu0
    %v175 = vadd.f32 %v94, %v174
    %v176 = vpop.f32.mrb[0].mxu0
    %177 = vdwg.mxu0
    %v178 = vmul.f32 %v170, 0.5
    %v179 = vmul.f32 %v175, 0.5
    %v180 = vmul.f32 %v170, 0.70710677
    %v181 = vmul.f32 %v175, 0.70710677
    %v182 = verf.f32.pop %v180
    %v183 = verf.f32.pop %v181
    %v184 = vadd.f32 %v182, 1.0
    %v185 = vadd.f32 %v183, 1.0
    %v186 = vmul.f32 %v178, %v184
    %v187 = vmul.f32 %v179, %v185
    %v188 = vld [vmem:[#allocation3] sm:$0xff]
    %v189 = vld [vmem:[#allocation3 + $0x8] sm:$0xff]
    %v190 = vld [vmem:[%s5] sm:$0xff]
    %v191 = vld [vmem:[%s5 + $0x8] sm:$0xff]
    %v192 = vld [vmem:[%s5 + $0x10] sm:$0xff]
    %v193 = vld [vmem:[%s5 + $0x18] sm:$0xff]
    %v194 = vld [vmem:[%s5 + $0x20] sm:$0xff]
    %v195 = vld [vmem:[%s5 + $0x28] sm:$0xff]
    %v196 = vld [vmem:[%s5 + $0x30] sm:$0xff]
    %v197 = vld [vmem:[%s5 + $0x38] sm:$0xff]
    %vm198 = vcmask 523264
    %v200 = vsel %vm198, %v186, 0
    %v203 = vsel %vm198, %v187, 0
    %205 = vmatprep.subr.mxu0 0.0
    %206 = vmatpush1.msra.mxu0 %v190
    %207 = vmatprep.subr.mxu0 0.0
    %208 = vmatpush1.msra.mxu0 %v191
    %209 = vmatprep.subr.mxu0 0.0
    %210 = vmatpush1.msra.mxu0 %v192
    %211 = vmatprep.subr.mxu0 0.0
    %212 = vmatpush1.msra.mxu0 %v193
    %213 = vmatprep.subr.mxu0 0.0
    %214 = vmatpush1.msra.mxu0 %v194
    %215 = vmatprep.subr.mxu0 0.0
    %216 = vmatpush1.msra.mxu0 %v195
    %217 = vmatprep.subr.mxu0 0.0
    %218 = vmatpush1.msra.mxu0 %v196
    %219 = vmatprep.subr.mxu0 0.0
    %220 = vmatpush1.msra.mxu0 %v197
    %221 = vmatprep.subr.mxu0 0.0
    %222 = vmatpush1.msra.mxu0 0.0
    %223 = vmatprep.subr.mxu0 0.0
    %224 = vmatpush1.msra.mxu0 0.0
    %225 = vmatprep.subr.mxu0 0.0
    %226 = vmatpush1.msra.mxu0 0.0
    %227 = vmatprep.subr.mxu0 0.0
    %228 = vmatpush1.msra.mxu0 0.0
    %229 = vmatprep.subr.mxu0 0.0
    %230 = vmatpush1.msra.mxu0 0.0
    %231 = vmatprep.subr.mxu0 0.0
    %232 = vmatpush1.msra.mxu0 0.0
    %233 = vmatprep.subr.mxu0 0.0
    %234 = vmatpush1.msra.mxu0 0.0
    %235 = vmatprep.subr.mxu0 0.0
    %236 = vmatpush1.msra.mxu0 0.0
    %237 = vmatprep.subr.mxu0 0.0
    %238 = vmatpush1.msra.mxu0 0.0
    %239 = vmatprep.subr.mxu0 0.0
    %240 = vmatpush1.msra.mxu0 0.0
    %241 = vmatprep.subr.mxu0 0.0
    %242 = vmatpush1.msra.mxu0 0.0
    %243 = vmatprep.subr.mxu0 0.0
    %244 = vmatpush1.msra.mxu0 0.0
    %245 = vmatprep.subr.mxu0 0.0
    %246 = vmatpush1.msra.mxu0 0.0
    %247 = vmatprep.subr.mxu0 0.0
    %248 = vmatpush1.msra.mxu0 0.0
    %249 = vmatprep.subr.mxu0 0.0
    %250 = vmatpush1.msra.mxu0 0.0
    %251 = vmatprep.subr.mxu0 0.0
    %252 = vmatpush1.msra.mxu0 0.0
    %253 = vmatprep.subr.mxu0 0.0
    %254 = vmatpush1.msra.mxu0 0.0
    %255 = vmatprep.subr.mxu0 0.0
    %256 = vmatpush1.msra.mxu0 0.0
    %257 = vmatprep.subr.mxu0 0.0
    %258 = vmatpush1.msra.mxu0 0.0
    %259 = vmatprep.subr.mxu0 0.0
    %260 = vmatpush1.msra.mxu0 0.0
    %261 = vmatprep.subr.mxu0 0.0
    %262 = vmatpush1.msra.mxu0 0.0
    %263 = vmatprep.subr.mxu0 0.0
    %264 = vmatpush1.msra.mxu0 0.0
    %265 = vmatprep.subr.mxu0 0.0
    %266 = vmatpush1.msra.mxu0 0.0
    %267 = vmatprep.subr.mxu0 0.0
    %268 = vmatpush1.msra.mxu0 0.0
    %269 = vmatprep.mubr.f32.mxu0 0.0
    %270 = vmatmul.mubr.f32.gmra.mrb[0].mxu0 %v200
    %v271 = vpop.f32.mrb[0].mxu0
    %v272 = vadd.f32 0.0, %v271
    %v273 = vpop.f32.mrb[0].mxu0
    %274 = vmatprep.mubr.f32.mxu0 0.0
    %275 = vmatmul.mubr.f32.gmra.mrb[0].mxu0 %v203
    %v276 = vpop.f32.mrb[0].mxu0
    %v277 = vadd.f32 0.0, %v276
    %v278 = vpop.f32.mrb[0].mxu0
    %279 = vdwg.mxu0
    %v280 = vadd.f32 %v188, %v272
    %v281 = vadd.f32 %v189, %v277
    %282 = vst.msk [vmem:[#allocation3] sm:$0xff] %vm96, %v280
    %283 = vst.msk [vmem:[#allocation3 + $0x8] sm:$0xff] %vm96, %v281
    // Predicated region
    $region34: #{tpu_custom_call.1} parent=1 // pred_check
      %p284 = pneg %p27
    $region35: #{tpu_custom_call.1} parent=1 // pred_check_branch
      %286 = sbr.rel (%p284) target = $region37
    $region36: #{tpu_custom_call.1} parent=1 // pred_region
      %v287 = vld [vmem:[#allocation3] sm:$0xff]
      %v288 = vld [vmem:[#allocation3 + $0x8] sm:$0xff]
      %v289 = vld [vmem:[%s6] sm:$0x1]
      %v291 = vlaneseq
      %v292 = vshrl.u32 %v291, 7
      %v293 = vsub.s32 0, %v292
      %v294 = vrot.slane %v289, %v293
      %v296 = vadd.f32 %v287, %v294
      %v297 = vadd.f32 %v288, %v294
      %v298 = vld [vmem:[%s0] sm:$0xff]
      %v299 = vld [vmem:[%s0 + $0x8] sm:$0xff]
      %v300 = vadd.f32 %v298, %v296
      %v301 = vadd.f32 %v299, %v297
      %302 = vst.msk [vmem:[#allocation4] sm:$0xff] %vm96, %v300
      %303 = vst.msk [vmem:[#allocation4 + $0x8] sm:$0xff] %vm96, %v301
    $region37: #{tpu_custom_call.1} parent=1 // pred_fallthru
      _
    // Predicated region
    $region38: #{tpu_custom_call.1} parent=1 // pred_check
      _
    $region39: #{tpu_custom_call.1} parent=1 // pred_check_branch
      %305 = sbr.rel (0) target = $region41
    $region40: #{tpu_custom_call.1} parent=1 // pred_region
      %s307 = ssub.s32 256, 256
      %308 = vsyncadd [#allocation5], %s307
      %s309 = sshll.u32 [#allocation4], 4
      %s310 = int_to_ptr.vmem [resolvable:$true] %s309
      %315 = dma.vmem_to_hbm [thread:$0]  %s310, 256, %s7, [#allocation5], 128, 128, 8
    $region41: #{tpu_custom_call.1} parent=1 // pred_fallthru
      _
    // Predicated region
    $region42: #{tpu_custom_call.1} parent=1 // pred_check
      _
    $region43: #{tpu_custom_call.1} parent=1 // pred_check_branch
      %317 = sbr.rel (0) target = $region45
    $region44: #{tpu_custom_call.1} parent=1 // pred_region
      %318 = dma.done [#allocation5], 256
    $region45: #{tpu_custom_call.1} parent=1 // pred_fallthru
      _
    %319 = vsyncpa [#allocation5], 1

</llo_original>
